<compile_context>
chip_gen: v7x
topology: tpu7x:2x2x1
jax: 0.10.0
libtpu: 0.0.40
codegen_flags: <defaults>
</compile_context>

<pallas_src>
import functools

import jax
import jax.numpy as jnp
from jax.experimental import pallas as pl
from jax.experimental.pallas import tpu as pltpu

_LANES = 128


def _tversky_stats_kernel(pred_ref, tgt_ref, tp_ref, sp_ref, cnt_ref, *,
                          tiles_per_chunk, n_row_tiles, rows_valid_last):
    # pred_ref: (1, C, RB, 128) caller dtype      tgt_ref: (1, RB, 128) int32
    # tp/sp/cnt_ref: (1, 1, C, 128) f32 accumulators, resident across the
    # last ("arbitrary") grid axis.
    C = pred_ref.shape[1]
    RB = pred_ref.shape[2]
    s_idx = pl.program_id(2)

    @pl.when(s_idx == 0)
    def _init():
        tp_ref[...] = jnp.zeros_like(tp_ref)
        sp_ref[...] = jnp.zeros_like(sp_ref)
        cnt_ref[...] = jnp.zeros_like(cnt_ref)

    def accumulate(valid):
        # Per-class spatial slabs; class axis is a short unrolled loop so all
        # vector ops run on dense (RB, 128) spatial tiles.
        xs = [pred_ref[0, c] for c in range(C)]                  # (RB, 128)
        if pred_ref.dtype != jnp.bfloat16:
            xs = [x.astype(jnp.float32) for x in xs]             # f32 path
        # Numerically-stable softmax over classes: C-1 elementwise maxes.
        m = xs[0]
        for c in range(1, C):
            m = jnp.maximum(m, xs[c])
        # exp in the input dtype (bf16 on v6e/v7x halves VALU+EUP cost),
        # accumulate in f32.
        es = [jnp.exp(xs[c] - m).astype(jnp.float32) for c in range(C)]
        denom = es[0]
        for c in range(1, C):
            denom = denom + es[c]
        inv = pl.reciprocal(denom, approx=True)                  # EUP, ~free
        tgt = tgt_ref[0]                                         # (RB, 128)

        for c in range(C):
            p_c = es[c] * inv                                    # (RB, 128) f32
            mask_c = tgt == c
            if valid is not None:
                mask_c = jnp.logical_and(mask_c, valid)
                sp_val = jnp.where(valid, p_c, 0.0)
            else:
                sp_val = p_c
            tp_part = jnp.sum(jnp.where(mask_c, p_c, 0.0), axis=0, keepdims=True)
            sp_part = jnp.sum(sp_val, axis=0, keepdims=True)
            cnt_part = jnp.sum(jnp.where(mask_c, 1.0, 0.0), axis=0, keepdims=True)
            tp_ref[0, 0, c:c + 1, :] += tp_part
            sp_ref[0, 0, c:c + 1, :] += sp_part
            cnt_ref[0, 0, c:c + 1, :] += cnt_part

    if rows_valid_last == RB:
        # Row count divides evenly: never pay any masking.
        accumulate(None)
    else:
        # Only the globally-last row tile is ragged; garbage rows beyond the
        # array (Pallas does NOT zero-fill OOB block reads) are masked out of
        # tp, sp and cnt.  NaN/Inf from garbage logits stay confined to their
        # own (masked) voxels because everything above is per-voxel.
        global_tile = pl.program_id(0) * tiles_per_chunk + s_idx
        is_last = global_tile == (n_row_tiles - 1)

        @pl.when(global_tile != (n_row_tiles - 1))
        def _full():
            accumulate(None)

        @pl.when(is_last)
        def _ragged():
            row_ids = jax.lax.broadcasted_iota(jnp.int32, (RB, _LANES), 0)
            accumulate(row_ids < rows_valid_last)


@functools.partial(jax.jit,
                   static_argnames=("alpha", "beta", "smooth", "max_rows_per_tile"))
def tversky_loss_3d(pred, target, alpha=0.7, beta=0.3, smooth=1e-5,
                    max_rows_per_tile=None):
    """pred: (B, C, D, H, W) float logits, target: (B, D, H, W) int -> scalar."""
    B, C, D, H, W = pred.shape
    S = D * H * W
    L = _LANES

    tgt = target
    if tgt.dtype != jnp.int32:
        tgt = tgt.astype(jnp.int32)

    pred_flat = pred.reshape(B, C, S)
    tgt_flat = tgt.reshape(B, S)

    pad = (-S) % L
    if pad:
        # TODO(synk): fallback only — this materialises one extra HBM copy of
        # pred.  Padded voxels get zero logits (uniform softmax, corrected in
        # the glue) and sentinel target C (never matches a class).
        pred_flat = jnp.pad(pred_flat, ((0, 0), (0, 0), (0, pad)))
        tgt_flat = jnp.pad(tgt_flat, ((0, 0), (0, pad)), constant_values=C)
    Sp = S + pad
    NR = Sp // L
    pred4 = pred_flat.reshape(B, C, NR, L)      # trailing-dim split
    tgt3 = tgt_flat.reshape(B, NR, L)

    # ---- row-tile sizing against an honest VMEM footprint ------------------
    pb = pred.dtype.itemsize
    per_row_bytes = L * (2 * C * pb            # pred block, double-buffered
                         + 2 * 4               # int32 target block, double-buffered
                         + (2 * C + 4) * 4)    # live f32 temporaries (e, m, denom, p, selects)
    try:
        vmem_cap = int(pltpu.get_tpu_info().vmem_capacity_bytes)
    except Exception:
        vmem_cap = 64 * 1024 * 1024            # assume the smallest (v7x)
    vmem_limit = int(max(32 * 2**20, min(vmem_cap - 16 * 2**20, 80 * 2**20)))
    budget = min(vmem_limit // 2, 24 * 2**20)

    RB = max(8, (budget // per_row_bytes) // 8 * 8)
    if max_rows_per_tile is not None:
        RB = max(8, min(RB, (max_rows_per_tile // 8) * 8))
    if RB >= NR:
        RB = NR                                 # single tile == full dim (any size OK)
    n_tiles = -(-NR // RB)
    rows_valid_last = NR - (n_tiles - 1) * RB   # static; == RB when evenly divisible

    # ---- 2-way spatial split so an odd number of batch blocks still fills
    # both v7x TensorCores; neutral on single-TC v5e/v6e.
    n_par = 2 if (B % 2 == 1 and n_tiles % 2 == 0) else 1
    tpc = n_tiles // n_par

    grid = (n_par, B, tpc)
    stat_shape = jax.ShapeDtypeStruct((n_par, B, C, L), jnp.float32)
    stat_spec = pl.BlockSpec((1, 1, C, L), lambda p, b, s: (p, b, 0, 0))

    kernel = functools.partial(_tversky_stats_kernel,
                               tiles_per_chunk=tpc,
                               n_row_tiles=n_tiles,
                               rows_valid_last=rows_valid_last)

    tp, sp, cnt = pl.pallas_call(
        kernel,
        out_shape=(stat_shape, stat_shape, stat_shape),
        grid_spec=pltpu.PrefetchScalarGridSpec(
            num_scalar_prefetch=0,
            grid=grid,
            in_specs=[
                pl.BlockSpec((1, C, RB, L), lambda p, b, s: (b, 0, p * tpc + s, 0)),
                pl.BlockSpec((1, RB, L), lambda p, b, s: (b, p * tpc + s, 0)),
            ],
            out_specs=[stat_spec, stat_spec, stat_spec],
        ),
        compiler_params=pltpu.CompilerParams(
            dimension_semantics=("parallel", "parallel", "arbitrary"),
            vmem_limit_bytes=vmem_limit),
    )(pred4, tgt3)

    # Combine per-chunk / per-lane partials and recover FP / FN algebraically.
    tp = tp.sum(axis=(0, 3))                    # (B, C)
    sp = sp.sum(axis=(0, 3))
    cnt = cnt.sum(axis=(0, 3))
    if pad:
        sp = sp - pad / C                       # zero-logit pad == uniform softmax
    fp = sp - tp
    fn = cnt - tp

    tversky = (tp + smooth) / (tp + alpha * fp + beta * fn + smooth)
    return 1.0 - jnp.mean(tversky)


def _reference_loss(pred, target, alpha=0.7, beta=0.3, smooth=1e-5):
    p = jax.nn.softmax(pred.astype(jnp.float32), axis=1)
    C = pred.shape[1]
    oh = jax.nn.one_hot(target, C, dtype=jnp.float32)          # (B,D,H,W,C)
    oh = jnp.transpose(oh, (0, 4, 1, 2, 3))                    # (B,C,D,H,W)
    tp = jnp.sum(p * oh, axis=(2, 3, 4))
    fp = jnp.sum(p * (1 - oh), axis=(2, 3, 4))
    fn = jnp.sum((1 - p) * oh, axis=(2, 3, 4))
    tversky = (tp + smooth) / (tp + alpha * fp + beta * fn + smooth)
    return 1.0 - jnp.mean(tversky)


if __name__ == "__main__":
    key = jax.random.PRNGKey(0)
    k1, k2, k3, k4 = jax.random.split(key, 4)

    # Primary check: B=2, C=4, 8x8x8 volume (S=512, multiple of 128 -> no pad).
    B, C, D, H, W = 2, 4, 8, 8, 8
    pred = jax.random.normal(k1, (B, C, D, H, W), dtype=jnp.float32)
    target = jax.random.randint(k2, (B, D, H, W), 0, C, dtype=jnp.int32)

    loss = tversky_loss_3d(pred, target)
    jax.block_until_ready(loss)
    ref = _reference_loss(pred, target)
    # Tolerance relaxed vs 1e-5 because of pl.reciprocal(approx=True).
    assert jnp.allclose(loss, ref, atol=2e-3, rtol=2e-3), (loss, ref)

    # bf16 logits: exercises the bf16 max/sub/exp fast path (f32 accumulation).
    loss_bf16 = tversky_loss_3d(pred.astype(jnp.bfloat16), target)
    jax.block_until_ready(loss_bf16)
    assert jnp.allclose(loss_bf16, ref, atol=5e-2, rtol=5e-2), (loss_bf16, ref)

    # Ragged last row-tile + 2-way spatial split (odd B): in-kernel masking.
    pred2 = jax.random.normal(k3, (1, C, 6, 16, 16), dtype=jnp.float32)   # S=1536 -> 12 rows
    target2 = jax.random.randint(k4, (1, 6, 16, 16), 0, C, dtype=jnp.int32)
    loss2 = tversky_loss_3d(pred2, target2, max_rows_per_tile=8)
    jax.block_until_ready(loss2)
    ref2 = _reference_loss(pred2, target2)
    assert jnp.allclose(loss2, ref2, atol=2e-3, rtol=2e-3), (loss2, ref2)

    # S not a multiple of 128: pad fallback + exact glue-side sp correction.
    pred3 = jax.random.normal(k1, (2, C, 4, 4, 4), dtype=jnp.float32)     # S=64
    target3 = jax.random.randint(k2, (2, 4, 4, 4), 0, C, dtype=jnp.int32)
    loss3 = tversky_loss_3d(pred3, target3)
    jax.block_until_ready(loss3)
    ref3 = _reference_loss(pred3, target3)
    assert jnp.allclose(loss3, ref3, atol=2e-3, rtol=2e-3), (loss3, ref3)

    print("KERNEL_OK")
</pallas_src>

<mosaic_0001>
module attributes {stable_mosaic.version = 11 : i64} {
  func.func @_tversky_stats_kernel(%arg0: i32, %arg1: i32, %arg2: i32, %arg3: memref<1x4x4x128xf32, #tpu.memory_space<vmem>>, %arg4: memref<1x4x128xi32, #tpu.memory_space<vmem>>, %arg5: memref<1x1x4x128xf32, #tpu.memory_space<vmem>>, %arg6: memref<1x1x4x128xf32, #tpu.memory_space<vmem>>, %arg7: memref<1x1x4x128xf32, #tpu.memory_space<vmem>>) attributes {dimension_semantics = [#tpu.dimension_semantics<parallel>, #tpu.dimension_semantics<parallel>, #tpu.dimension_semantics<arbitrary>], iteration_bounds = array<i64: 1, 2, 1>, scalar_prefetch = 0 : i64, scratch_operands = 0 : i64, tpu.core_type = #tpu.core_type<tc>, window_params = [{transform_indices = @transform_0, window_bounds = array<i64: 1, 4, 4, 128>}, {transform_indices = @transform_1, window_bounds = array<i64: 1, 4, 128>}, {transform_indices = @transform_2, window_bounds = array<i64: 1, 1, 4, 128>}, {transform_indices = @transform_3, window_bounds = array<i64: 1, 1, 4, 128>}, {transform_indices = @transform_4, window_bounds = array<i64: 1, 1, 4, 128>}]} {
    %c0_i32 = arith.constant 0 : i32
    %0 = arith.cmpi eq, %arg2, %c0_i32 : i32
    %1 = arith.extui %0 : i1 to i32
    %c0_i32_0 = arith.constant 0 : i32
    %2 = arith.cmpi ne, %1, %c0_i32_0 : i32
    scf.if %2 {
      %cst_136 = arith.constant 0.000000e+00 : f32
      %156 = vector.broadcast %cst_136 : f32 to vector<1x1x4x128xf32>
      %c0_137 = arith.constant 0 : index
      %c0_138 = arith.constant 0 : index
      %c0_139 = arith.constant 0 : index
      %c0_140 = arith.constant 0 : index
      %157 = vector.load %arg5[%c0_137, %c0_138, %c0_139, %c0_140] : memref<1x1x4x128xf32, #tpu.memory_space<vmem>>, vector<1x1x4x128xf32>
      tpu.vector_store %arg5[%c0_137, %c0_138, %c0_139, %c0_140], %156 {strides = array<i32>} : memref<1x1x4x128xf32, #tpu.memory_space<vmem>>, vector<1x1x4x128xf32>,
      %cst_141 = arith.constant 0.000000e+00 : f32
      %158 = vector.broadcast %cst_141 : f32 to vector<1x1x4x128xf32>
      %c0_142 = arith.constant 0 : index
      %c0_143 = arith.constant 0 : index
      %c0_144 = arith.constant 0 : index
      %c0_145 = arith.constant 0 : index
      %159 = vector.load %arg6[%c0_142, %c0_143, %c0_144, %c0_145] : memref<1x1x4x128xf32, #tpu.memory_space<vmem>>, vector<1x1x4x128xf32>
      tpu.vector_store %arg6[%c0_142, %c0_143, %c0_144, %c0_145], %158 {strides = array<i32>} : memref<1x1x4x128xf32, #tpu.memory_space<vmem>>, vector<1x1x4x128xf32>,
      %cst_146 = arith.constant 0.000000e+00 : f32
      %160 = vector.broadcast %cst_146 : f32 to vector<1x1x4x128xf32>
      %c0_147 = arith.constant 0 : index
      %c0_148 = arith.constant 0 : index
      %c0_149 = arith.constant 0 : index
      %c0_150 = arith.constant 0 : index
      %161 = vector.load %arg7[%c0_147, %c0_148, %c0_149, %c0_150] : memref<1x1x4x128xf32, #tpu.memory_space<vmem>>, vector<1x1x4x128xf32>
      tpu.vector_store %arg7[%c0_147, %c0_148, %c0_149, %c0_150], %160 {strides = array<i32>} : memref<1x1x4x128xf32, #tpu.memory_space<vmem>>, vector<1x1x4x128xf32>,
    } else {
    }
    %c0 = arith.constant 0 : index
    %c0_1 = arith.constant 0 : index
    %c0_2 = arith.constant 0 : index
    %c0_3 = arith.constant 0 : index
    %3 = vector.load %arg3[%c0, %c0_1, %c0_2, %c0_3] : memref<1x4x4x128xf32, #tpu.memory_space<vmem>>, vector<1x1x4x128xf32>
    %4 = vector.shape_cast %3 : vector<1x1x4x128xf32> to vector<4x128xf32>
    %c0_4 = arith.constant 0 : index
    %c1 = arith.constant 1 : index
    %c0_5 = arith.constant 0 : index
    %c0_6 = arith.constant 0 : index
    %5 = vector.load %arg3[%c0_4, %c1, %c0_5, %c0_6] : memref<1x4x4x128xf32, #tpu.memory_space<vmem>>, vector<1x1x4x128xf32>
    %6 = vector.shape_cast %5 : vector<1x1x4x128xf32> to vector<4x128xf32>
    %c0_7 = arith.constant 0 : index
    %c2 = arith.constant 2 : index
    %c0_8 = arith.constant 0 : index
    %c0_9 = arith.constant 0 : index
    %7 = vector.load %arg3[%c0_7, %c2, %c0_8, %c0_9] : memref<1x4x4x128xf32, #tpu.memory_space<vmem>>, vector<1x1x4x128xf32>
    %8 = vector.shape_cast %7 : vector<1x1x4x128xf32> to vector<4x128xf32>
    %c0_10 = arith.constant 0 : index
    %c3 = arith.constant 3 : index
    %c0_11 = arith.constant 0 : index
    %c0_12 = arith.constant 0 : index
    %9 = vector.load %arg3[%c0_10, %c3, %c0_11, %c0_12] : memref<1x4x4x128xf32, #tpu.memory_space<vmem>>, vector<1x1x4x128xf32>
    %10 = vector.shape_cast %9 : vector<1x1x4x128xf32> to vector<4x128xf32>
    %11 = arith.maximumf %4, %6 : vector<4x128xf32>
    %12 = arith.maximumf %11, %8 : vector<4x128xf32>
    %13 = arith.maximumf %12, %10 : vector<4x128xf32>
    %14 = arith.subf %4, %13 : vector<4x128xf32>
    %15 = math.exp %14 : vector<4x128xf32>
    %16 = arith.subf %6, %13 : vector<4x128xf32>
    %17 = math.exp %16 : vector<4x128xf32>
    %18 = arith.subf %8, %13 : vector<4x128xf32>
    %19 = math.exp %18 : vector<4x128xf32>
    %20 = arith.subf %10, %13 : vector<4x128xf32>
    %21 = math.exp %20 : vector<4x128xf32>
    %22 = arith.addf %15, %17 : vector<4x128xf32>
    %23 = arith.addf %22, %19 : vector<4x128xf32>
    %24 = arith.addf %23, %21 : vector<4x128xf32>
    %25 = tpu.reciprocal %24 {approx = true} : vector<4x128xf32> -> vector<4x128xf32>
    %c0_13 = arith.constant 0 : index
    %c0_14 = arith.constant 0 : index
    %c0_15 = arith.constant 0 : index
    %26 = vector.load %arg4[%c0_13, %c0_14, %c0_15] : memref<1x4x128xi32, #tpu.memory_space<vmem>>, vector<1x4x128xi32>
    %27 = vector.shape_cast %26 : vector<1x4x128xi32> to vector<4x128xi32>
    %28 = arith.mulf %15, %25 : vector<4x128xf32>
    %c0_i32_16 = arith.constant 0 : i32
    %29 = vector.broadcast %c0_i32_16 : i32 to vector<4x128xi32>
    %30 = arith.cmpi eq, %27, %29 : vector<4x128xi32>
    %cst = arith.constant 0.000000e+00 : f32
    %31 = vector.broadcast %cst : f32 to vector<4x128xf32>
    %32 = arith.select %30, %28, %31 : vector<4x128xi1>, vector<4x128xf32>
    %cst_17 = arith.constant dense<0.000000e+00> : vector<128xf32>
    %33 = vector.multi_reduction <add>, %32, %cst_17 [0] : vector<4x128xf32> to vector<128xf32>
    %34 = vector.shape_cast %33 : vector<128xf32> to vector<1x128xf32>
    %cst_18 = arith.constant dense<0.000000e+00> : vector<128xf32>
    %35 = vector.multi_reduction <add>, %28, %cst_18 [0] : vector<4x128xf32> to vector<128xf32>
    %36 = vector.shape_cast %35 : vector<128xf32> to vector<1x128xf32>
    %cst_19 = arith.constant 1.000000e+00 : f32
    %cst_20 = arith.constant 0.000000e+00 : f32
    %37 = vector.broadcast %cst_19 : f32 to vector<4x128xf32>
    %38 = vector.broadcast %cst_20 : f32 to vector<4x128xf32>
    %39 = arith.select %30, %37, %38 : vector<4x128xi1>, vector<4x128xf32>
    %cst_21 = arith.constant dense<0.000000e+00> : vector<128xf32>
    %40 = vector.multi_reduction <add>, %39, %cst_21 [0] : vector<4x128xf32> to vector<128xf32>
    %41 = vector.shape_cast %40 : vector<128xf32> to vector<1x128xf32>
    %c0_22 = arith.constant 0 : index
    %c0_23 = arith.constant 0 : index
    %c0_24 = arith.constant 0 : index
    %c0_25 = arith.constant 0 : index
    %42 = vector.load %arg5[%c0_22, %c0_23, %c0_24, %c0_25] : memref<1x1x4x128xf32, #tpu.memory_space<vmem>>, vector<1x1x1x128xf32>
    %43 = vector.shape_cast %42 : vector<1x1x1x128xf32> to vector<1x128xf32>
    %44 = arith.addf %43, %34 : vector<1x128xf32>
    %c0_26 = arith.constant 0 : index
    %c0_27 = arith.constant 0 : index
    %c0_28 = arith.constant 0 : index
    %c0_29 = arith.constant 0 : index
    %45 = vector.load %arg5[%c0_26, %c0_27, %c0_28, %c0_29] : memref<1x1x4x128xf32, #tpu.memory_space<vmem>>, vector<1x1x1x128xf32>
    %46 = vector.shape_cast %45 : vector<1x1x1x128xf32> to vector<1x128xf32>
    %47 = vector.shape_cast %44 : vector<1x128xf32> to vector<1x1x1x128xf32>
    tpu.vector_store %arg5[%c0_26, %c0_27, %c0_28, %c0_29], %47 {strides = array<i32>} : memref<1x1x4x128xf32, #tpu.memory_space<vmem>>, vector<1x1x1x128xf32>,
    %c0_30 = arith.constant 0 : index
    %c0_31 = arith.constant 0 : index
    %c0_32 = arith.constant 0 : index
    %c0_33 = arith.constant 0 : index
    %48 = vector.load %arg6[%c0_30, %c0_31, %c0_32, %c0_33] : memref<1x1x4x128xf32, #tpu.memory_space<vmem>>, vector<1x1x1x128xf32>
    %49 = vector.shape_cast %48 : vector<1x1x1x128xf32> to vector<1x128xf32>
    %50 = arith.addf %49, %36 : vector<1x128xf32>
    %c0_34 = arith.constant 0 : index
    %c0_35 = arith.constant 0 : index
    %c0_36 = arith.constant 0 : index
    %c0_37 = arith.constant 0 : index
    %51 = vector.load %arg6[%c0_34, %c0_35, %c0_36, %c0_37] : memref<1x1x4x128xf32, #tpu.memory_space<vmem>>, vector<1x1x1x128xf32>
    %52 = vector.shape_cast %51 : vector<1x1x1x128xf32> to vector<1x128xf32>
    %53 = vector.shape_cast %50 : vector<1x128xf32> to vector<1x1x1x128xf32>
    tpu.vector_store %arg6[%c0_34, %c0_35, %c0_36, %c0_37], %53 {strides = array<i32>} : memref<1x1x4x128xf32, #tpu.memory_space<vmem>>, vector<1x1x1x128xf32>,
    %c0_38 = arith.constant 0 : index
    %c0_39 = arith.constant 0 : index
    %c0_40 = arith.constant 0 : index
    %c0_41 = arith.constant 0 : index
    %54 = vector.load %arg7[%c0_38, %c0_39, %c0_40, %c0_41] : memref<1x1x4x128xf32, #tpu.memory_space<vmem>>, vector<1x1x1x128xf32>
    %55 = vector.shape_cast %54 : vector<1x1x1x128xf32> to vector<1x128xf32>
    %56 = arith.addf %55, %41 : vector<1x128xf32>
    %c0_42 = arith.constant 0 : index
    %c0_43 = arith.constant 0 : index
    %c0_44 = arith.constant 0 : index
    %c0_45 = arith.constant 0 : index
    %57 = vector.load %arg7[%c0_42, %c0_43, %c0_44, %c0_45] : memref<1x1x4x128xf32, #tpu.memory_space<vmem>>, vector<1x1x1x128xf32>
    %58 = vector.shape_cast %57 : vector<1x1x1x128xf32> to vector<1x128xf32>
    %59 = vector.shape_cast %56 : vector<1x128xf32> to vector<1x1x1x128xf32>
    tpu.vector_store %arg7[%c0_42, %c0_43, %c0_44, %c0_45], %59 {strides = array<i32>} : memref<1x1x4x128xf32, #tpu.memory_space<vmem>>, vector<1x1x1x128xf32>,
    %60 = arith.mulf %17, %25 : vector<4x128xf32>
    %c1_i32 = arith.constant 1 : i32
    %61 = vector.broadcast %c1_i32 : i32 to vector<4x128xi32>
    %62 = arith.cmpi eq, %27, %61 : vector<4x128xi32>
    %cst_46 = arith.constant 0.000000e+00 : f32
    %63 = vector.broadcast %cst_46 : f32 to vector<4x128xf32>
    %64 = arith.select %62, %60, %63 : vector<4x128xi1>, vector<4x128xf32>
    %cst_47 = arith.constant dense<0.000000e+00> : vector<128xf32>
    %65 = vector.multi_reduction <add>, %64, %cst_47 [0] : vector<4x128xf32> to vector<128xf32>
    %66 = vector.shape_cast %65 : vector<128xf32> to vector<1x128xf32>
    %cst_48 = arith.constant dense<0.000000e+00> : vector<128xf32>
    %67 = vector.multi_reduction <add>, %60, %cst_48 [0] : vector<4x128xf32> to vector<128xf32>
    %68 = vector.shape_cast %67 : vector<128xf32> to vector<1x128xf32>
    %cst_49 = arith.constant 1.000000e+00 : f32
    %cst_50 = arith.constant 0.000000e+00 : f32
    %69 = vector.broadcast %cst_49 : f32 to vector<4x128xf32>
    %70 = vector.broadcast %cst_50 : f32 to vector<4x128xf32>
    %71 = arith.select %62, %69, %70 : vector<4x128xi1>, vector<4x128xf32>
    %cst_51 = arith.constant dense<0.000000e+00> : vector<128xf32>
    %72 = vector.multi_reduction <add>, %71, %cst_51 [0] : vector<4x128xf32> to vector<128xf32>
    %73 = vector.shape_cast %72 : vector<128xf32> to vector<1x128xf32>
    %c0_52 = arith.constant 0 : index
    %c0_53 = arith.constant 0 : index
    %c1_54 = arith.constant 1 : index
    %c0_55 = arith.constant 0 : index
    %74 = vector.load %arg5[%c0_52, %c0_53, %c1_54, %c0_55] : memref<1x1x4x128xf32, #tpu.memory_space<vmem>>, vector<1x1x1x128xf32>
    %75 = vector.shape_cast %74 : vector<1x1x1x128xf32> to vector<1x128xf32>
    %76 = arith.addf %75, %66 : vector<1x128xf32>
    %c0_56 = arith.constant 0 : index
    %c0_57 = arith.constant 0 : index
    %c1_58 = arith.constant 1 : index
    %c0_59 = arith.constant 0 : index
    %77 = vector.load %arg5[%c0_56, %c0_57, %c1_58, %c0_59] : memref<1x1x4x128xf32, #tpu.memory_space<vmem>>, vector<1x1x1x128xf32>
    %78 = vector.shape_cast %77 : vector<1x1x1x128xf32> to vector<1x128xf32>
    %79 = vector.shape_cast %76 : vector<1x128xf32> to vector<1x1x1x128xf32>
    tpu.vector_store %arg5[%c0_56, %c0_57, %c1_58, %c0_59], %79 {strides = array<i32>} : memref<1x1x4x128xf32, #tpu.memory_space<vmem>>, vector<1x1x1x128xf32>,
    %c0_60 = arith.constant 0 : index
    %c0_61 = arith.constant 0 : index
    %c1_62 = arith.constant 1 : index
    %c0_63 = arith.constant 0 : index
    %80 = vector.load %arg6[%c0_60, %c0_61, %c1_62, %c0_63] : memref<1x1x4x128xf32, #tpu.memory_space<vmem>>, vector<1x1x1x128xf32>
    %81 = vector.shape_cast %80 : vector<1x1x1x128xf32> to vector<1x128xf32>
    %82 = arith.addf %81, %68 : vector<1x128xf32>
    %c0_64 = arith.constant 0 : index
    %c0_65 = arith.constant 0 : index
    %c1_66 = arith.constant 1 : index
    %c0_67 = arith.constant 0 : index
    %83 = vector.load %arg6[%c0_64, %c0_65, %c1_66, %c0_67] : memref<1x1x4x128xf32, #tpu.memory_space<vmem>>, vector<1x1x1x128xf32>
    %84 = vector.shape_cast %83 : vector<1x1x1x128xf32> to vector<1x128xf32>
    %85 = vector.shape_cast %82 : vector<1x128xf32> to vector<1x1x1x128xf32>
    tpu.vector_store %arg6[%c0_64, %c0_65, %c1_66, %c0_67], %85 {strides = array<i32>} : memref<1x1x4x128xf32, #tpu.memory_space<vmem>>, vector<1x1x1x128xf32>,
    %c0_68 = arith.constant 0 : index
    %c0_69 = arith.constant 0 : index
    %c1_70 = arith.constant 1 : index
    %c0_71 = arith.constant 0 : index
    %86 = vector.load %arg7[%c0_68, %c0_69, %c1_70, %c0_71] : memref<1x1x4x128xf32, #tpu.memory_space<vmem>>, vector<1x1x1x128xf32>
    %87 = vector.shape_cast %86 : vector<1x1x1x128xf32> to vector<1x128xf32>
    %88 = arith.addf %87, %73 : vector<1x128xf32>
    %c0_72 = arith.constant 0 : index
    %c0_73 = arith.constant 0 : index
    %c1_74 = arith.constant 1 : index
    %c0_75 = arith.constant 0 : index
    %89 = vector.load %arg7[%c0_72, %c0_73, %c1_74, %c0_75] : memref<1x1x4x128xf32, #tpu.memory_space<vmem>>, vector<1x1x1x128xf32>
    %90 = vector.shape_cast %89 : vector<1x1x1x128xf32> to vector<1x128xf32>
    %91 = vector.shape_cast %88 : vector<1x128xf32> to vector<1x1x1x128xf32>
    tpu.vector_store %arg7[%c0_72, %c0_73, %c1_74, %c0_75], %91 {strides = array<i32>} : memref<1x1x4x128xf32, #tpu.memory_space<vmem>>, vector<1x1x1x128xf32>,
    %92 = arith.mulf %19, %25 : vector<4x128xf32>
    %c2_i32 = arith.constant 2 : i32
    %93 = vector.broadcast %c2_i32 : i32 to vector<4x128xi32>
    %94 = arith.cmpi eq, %27, %93 : vector<4x128xi32>
    %cst_76 = arith.constant 0.000000e+00 : f32
    %95 = vector.broadcast %cst_76 : f32 to vector<4x128xf32>
    %96 = arith.select %94, %92, %95 : vector<4x128xi1>, vector<4x128xf32>
    %cst_77 = arith.constant dense<0.000000e+00> : vector<128xf32>
    %97 = vector.multi_reduction <add>, %96, %cst_77 [0] : vector<4x128xf32> to vector<128xf32>
    %98 = vector.shape_cast %97 : vector<128xf32> to vector<1x128xf32>
    %cst_78 = arith.constant dense<0.000000e+00> : vector<128xf32>
    %99 = vector.multi_reduction <add>, %92, %cst_78 [0] : vector<4x128xf32> to vector<128xf32>
    %100 = vector.shape_cast %99 : vector<128xf32> to vector<1x128xf32>
    %cst_79 = arith.constant 1.000000e+00 : f32
    %cst_80 = arith.constant 0.000000e+00 : f32
    %101 = vector.broadcast %cst_79 : f32 to vector<4x128xf32>
    %102 = vector.broadcast %cst_80 : f32 to vector<4x128xf32>
    %103 = arith.select %94, %101, %102 : vector<4x128xi1>, vector<4x128xf32>
    %cst_81 = arith.constant dense<0.000000e+00> : vector<128xf32>
    %104 = vector.multi_reduction <add>, %103, %cst_81 [0] : vector<4x128xf32> to vector<128xf32>
    %105 = vector.shape_cast %104 : vector<128xf32> to vector<1x128xf32>
    %c0_82 = arith.constant 0 : index
    %c0_83 = arith.constant 0 : index
    %c2_84 = arith.constant 2 : index
    %c0_85 = arith.constant 0 : index
    %106 = vector.load %arg5[%c0_82, %c0_83, %c2_84, %c0_85] : memref<1x1x4x128xf32, #tpu.memory_space<vmem>>, vector<1x1x1x128xf32>
    %107 = vector.shape_cast %106 : vector<1x1x1x128xf32> to vector<1x128xf32>
    %108 = arith.addf %107, %98 : vector<1x128xf32>
    %c0_86 = arith.constant 0 : index
    %c0_87 = arith.constant 0 : index
    %c2_88 = arith.constant 2 : index
    %c0_89 = arith.constant 0 : index
    %109 = vector.load %arg5[%c0_86, %c0_87, %c2_88, %c0_89] : memref<1x1x4x128xf32, #tpu.memory_space<vmem>>, vector<1x1x1x128xf32>
    %110 = vector.shape_cast %109 : vector<1x1x1x128xf32> to vector<1x128xf32>
    %111 = vector.shape_cast %108 : vector<1x128xf32> to vector<1x1x1x128xf32>
    tpu.vector_store %arg5[%c0_86, %c0_87, %c2_88, %c0_89], %111 {strides = array<i32>} : memref<1x1x4x128xf32, #tpu.memory_space<vmem>>, vector<1x1x1x128xf32>,
    %c0_90 = arith.constant 0 : index
    %c0_91 = arith.constant 0 : index
    %c2_92 = arith.constant 2 : index
    %c0_93 = arith.constant 0 : index
    %112 = vector.load %arg6[%c0_90, %c0_91, %c2_92, %c0_93] : memref<1x1x4x128xf32, #tpu.memory_space<vmem>>, vector<1x1x1x128xf32>
    %113 = vector.shape_cast %112 : vector<1x1x1x128xf32> to vector<1x128xf32>
    %114 = arith.addf %113, %100 : vector<1x128xf32>
    %c0_94 = arith.constant 0 : index
    %c0_95 = arith.constant 0 : index
    %c2_96 = arith.constant 2 : index
    %c0_97 = arith.constant 0 : index
    %115 = vector.load %arg6[%c0_94, %c0_95, %c2_96, %c0_97] : memref<1x1x4x128xf32, #tpu.memory_space<vmem>>, vector<1x1x1x128xf32>
    %116 = vector.shape_cast %115 : vector<1x1x1x128xf32> to vector<1x128xf32>
    %117 = vector.shape_cast %114 : vector<1x128xf32> to vector<1x1x1x128xf32>
    tpu.vector_store %arg6[%c0_94, %c0_95, %c2_96, %c0_97], %117 {strides = array<i32>} : memref<1x1x4x128xf32, #tpu.memory_space<vmem>>, vector<1x1x1x128xf32>,
    %c0_98 = arith.constant 0 : index
    %c0_99 = arith.constant 0 : index
    %c2_100 = arith.constant 2 : index
    %c0_101 = arith.constant 0 : index
    %118 = vector.load %arg7[%c0_98, %c0_99, %c2_100, %c0_101] : memref<1x1x4x128xf32, #tpu.memory_space<vmem>>, vector<1x1x1x128xf32>
    %119 = vector.shape_cast %118 : vector<1x1x1x128xf32> to vector<1x128xf32>
    %120 = arith.addf %119, %105 : vector<1x128xf32>
    %c0_102 = arith.constant 0 : index
    %c0_103 = arith.constant 0 : index
    %c2_104 = arith.constant 2 : index
    %c0_105 = arith.constant 0 : index
    %121 = vector.load %arg7[%c0_102, %c0_103, %c2_104, %c0_105] : memref<1x1x4x128xf32, #tpu.memory_space<vmem>>, vector<1x1x1x128xf32>
    %122 = vector.shape_cast %121 : vector<1x1x1x128xf32> to vector<1x128xf32>
    %123 = vector.shape_cast %120 : vector<1x128xf32> to vector<1x1x1x128xf32>
    tpu.vector_store %arg7[%c0_102, %c0_103, %c2_104, %c0_105], %123 {strides = array<i32>} : memref<1x1x4x128xf32, #tpu.memory_space<vmem>>, vector<1x1x1x128xf32>,
    %124 = arith.mulf %21, %25 : vector<4x128xf32>
    %c3_i32 = arith.constant 3 : i32
    %125 = vector.broadcast %c3_i32 : i32 to vector<4x128xi32>
    %126 = arith.cmpi eq, %27, %125 : vector<4x128xi32>
    %cst_106 = arith.constant 0.000000e+00 : f32
    %127 = vector.broadcast %cst_106 : f32 to vector<4x128xf32>
    %128 = arith.select %126, %124, %127 : vector<4x128xi1>, vector<4x128xf32>
    %cst_107 = arith.constant dense<0.000000e+00> : vector<128xf32>
    %129 = vector.multi_reduction <add>, %128, %cst_107 [0] : vector<4x128xf32> to vector<128xf32>
    %130 = vector.shape_cast %129 : vector<128xf32> to vector<1x128xf32>
    %cst_108 = arith.constant dense<0.000000e+00> : vector<128xf32>
    %131 = vector.multi_reduction <add>, %124, %cst_108 [0] : vector<4x128xf32> to vector<128xf32>
    %132 = vector.shape_cast %131 : vector<128xf32> to vector<1x128xf32>
    %cst_109 = arith.constant 1.000000e+00 : f32
    %cst_110 = arith.constant 0.000000e+00 : f32
    %133 = vector.broadcast %cst_109 : f32 to vector<4x128xf32>
    %134 = vector.broadcast %cst_110 : f32 to vector<4x128xf32>
    %135 = arith.select %126, %133, %134 : vector<4x128xi1>, vector<4x128xf32>
    %cst_111 = arith.constant dense<0.000000e+00> : vector<128xf32>
    %136 = vector.multi_reduction <add>, %135, %cst_111 [0] : vector<4x128xf32> to vector<128xf32>
    %137 = vector.shape_cast %136 : vector<128xf32> to vector<1x128xf32>
    %c0_112 = arith.constant 0 : index
    %c0_113 = arith.constant 0 : index
    %c3_114 = arith.constant 3 : index
    %c0_115 = arith.constant 0 : index
    %138 = vector.load %arg5[%c0_112, %c0_113, %c3_114, %c0_115] : memref<1x1x4x128xf32, #tpu.memory_space<vmem>>, vector<1x1x1x128xf32>
    %139 = vector.shape_cast %138 : vector<1x1x1x128xf32> to vector<1x128xf32>
    %140 = arith.addf %139, %130 : vector<1x128xf32>
    %c0_116 = arith.constant 0 : index
    %c0_117 = arith.constant 0 : index
    %c3_118 = arith.constant 3 : index
    %c0_119 = arith.constant 0 : index
    %141 = vector.load %arg5[%c0_116, %c0_117, %c3_118, %c0_119] : memref<1x1x4x128xf32, #tpu.memory_space<vmem>>, vector<1x1x1x128xf32>
    %142 = vector.shape_cast %141 : vector<1x1x1x128xf32> to vector<1x128xf32>
    %143 = vector.shape_cast %140 : vector<1x128xf32> to vector<1x1x1x128xf32>
    tpu.vector_store %arg5[%c0_116, %c0_117, %c3_118, %c0_119], %143 {strides = array<i32>} : memref<1x1x4x128xf32, #tpu.memory_space<vmem>>, vector<1x1x1x128xf32>,
    %c0_120 = arith.constant 0 : index
    %c0_121 = arith.constant 0 : index
    %c3_122 = arith.constant 3 : index
    %c0_123 = arith.constant 0 : index
    %144 = vector.load %arg6[%c0_120, %c0_121, %c3_122, %c0_123] : memref<1x1x4x128xf32, #tpu.memory_space<vmem>>, vector<1x1x1x128xf32>
    %145 = vector.shape_cast %144 : vector<1x1x1x128xf32> to vector<1x128xf32>
    %146 = arith.addf %145, %132 : vector<1x128xf32>
    %c0_124 = arith.constant 0 : index
    %c0_125 = arith.constant 0 : index
    %c3_126 = arith.constant 3 : index
    %c0_127 = arith.constant 0 : index
    %147 = vector.load %arg6[%c0_124, %c0_125, %c3_126, %c0_127] : memref<1x1x4x128xf32, #tpu.memory_space<vmem>>, vector<1x1x1x128xf32>
    %148 = vector.shape_cast %147 : vector<1x1x1x128xf32> to vector<1x128xf32>
    %149 = vector.shape_cast %146 : vector<1x128xf32> to vector<1x1x1x128xf32>
    tpu.vector_store %arg6[%c0_124, %c0_125, %c3_126, %c0_127], %149 {strides = array<i32>} : memref<1x1x4x128xf32, #tpu.memory_space<vmem>>, vector<1x1x1x128xf32>,
    %c0_128 = arith.constant 0 : index
    %c0_129 = arith.constant 0 : index
    %c3_130 = arith.constant 3 : index
    %c0_131 = arith.constant 0 : index
    %150 = vector.load %arg7[%c0_128, %c0_129, %c3_130, %c0_131] : memref<1x1x4x128xf32, #tpu.memory_space<vmem>>, vector<1x1x1x128xf32>
    %151 = vector.shape_cast %150 : vector<1x1x1x128xf32> to vector<1x128xf32>
    %152 = arith.addf %151, %137 : vector<1x128xf32>
    %c0_132 = arith.constant 0 : index
    %c0_133 = arith.constant 0 : index
    %c3_134 = arith.constant 3 : index
    %c0_135 = arith.constant 0 : index
    %153 = vector.load %arg7[%c0_132, %c0_133, %c3_134, %c0_135] : memref<1x1x4x128xf32, #tpu.memory_space<vmem>>, vector<1x1x1x128xf32>
    %154 = vector.shape_cast %153 : vector<1x1x1x128xf32> to vector<1x128xf32>
    %155 = vector.shape_cast %152 : vector<1x128xf32> to vector<1x1x1x128xf32>
    tpu.vector_store %arg7[%c0_132, %c0_133, %c3_134, %c0_135], %155 {strides = array<i32>} : memref<1x1x4x128xf32, #tpu.memory_space<vmem>>, vector<1x1x1x128xf32>,
    return
  }
  func.func @transform_0(%arg0: i32, %arg1: i32, %arg2: i32) -> (i32, i32, i32, i32) {
    %c1_i32 = arith.constant 1 : i32
    %0 = arith.muli %arg0, %c1_i32 : i32
    %1 = arith.addi %0, %arg2 : i32
    %c0_i32 = arith.constant 0 : i32
    %c0_i32_0 = arith.constant 0 : i32
    %c0_i32_1 = arith.constant 0 : i32
    return %arg1, %c0_i32, %1, %c0_i32_0 : i32, i32, i32, i32
  }
  func.func @transform_1(%arg0: i32, %arg1: i32, %arg2: i32) -> (i32, i32, i32) {
    %c1_i32 = arith.constant 1 : i32
    %0 = arith.muli %arg0, %c1_i32 : i32
    %1 = arith.addi %0, %arg2 : i32
    %c0_i32 = arith.constant 0 : i32
    %c0_i32_0 = arith.constant 0 : i32
    return %arg1, %1, %c0_i32 : i32, i32, i32
  }
  func.func @transform_2(%arg0: i32, %arg1: i32, %arg2: i32) -> (i32, i32, i32, i32) {
    %c0_i32 = arith.constant 0 : i32
    %c0_i32_0 = arith.constant 0 : i32
    %c0_i32_1 = arith.constant 0 : i32
    return %arg0, %arg1, %c0_i32, %c0_i32_0 : i32, i32, i32, i32
  }
  func.func @transform_3(%arg0: i32, %arg1: i32, %arg2: i32) -> (i32, i32, i32, i32) {
    %c0_i32 = arith.constant 0 : i32
    %c0_i32_0 = arith.constant 0 : i32
    %c0_i32_1 = arith.constant 0 : i32
    return %arg0, %arg1, %c0_i32, %c0_i32_0 : i32, i32, i32, i32
  }
  func.func @transform_4(%arg0: i32, %arg1: i32, %arg2: i32) -> (i32, i32, i32, i32) {
    %c0_i32 = arith.constant 0 : i32
    %c0_i32_0 = arith.constant 0 : i32
    %c0_i32_1 = arith.constant 0 : i32
    return %arg0, %arg1, %c0_i32, %c0_i32_0 : i32, i32, i32, i32
  }
}

</mosaic_0001>

<llo_original>
// kernel: tversky_loss_3d.1
$region0: #{tversky_loss_3d.1}
  #allocation0 [shape = 'u32[]', space=smem, size = 0x4, offset = 0x4, fixed_abs, tag = 'smem constant byte address 0x4 - core index']
  #allocation1 [shape = 'u32[144,128]{1,0:T(1,128)}', space=vmem, size = 0x12000, scoped, tag = 'internal scratch']
  %s0 = inlined_call_operand.vmem [shape: f32[2,4,4,128], index: 0, kind: input, shape index: {}]
  %s1 = inlined_call_operand.vmem [shape: s32[2,4,128], index: 1, kind: input, shape index: {}]
  %s2 = inlined_call_operand.vmem [shape: f32[1,2,4,128], index: 2, kind: output, shape index: {0}]
  %s3 = inlined_call_operand.vmem [shape: f32[1,2,4,128], index: 3, kind: output, shape index: {1}]
  %s4 = inlined_call_operand.vmem [shape: f32[1,2,4,128], index: 4, kind: output, shape index: {2}]
  %5 = xla_tuple %s2, %s3, %s4
  %s6 = sld [smem:[#allocation0]]
  $region61: #{tversky_loss_3d.1} parent=0
    _
  %s8 = ssub.s32 1, %s6
  %s9 = scalar_select 0, %s8, %s6
  loop: start=0, step=1, limit=4
  $region2: #{tversky_loss_3d.1} parent=0 // loop_pre_header
    _
  $region3: #{tversky_loss_3d.1} parent=0 // loop_header
    %s11 = sphi 0, %s15
    %p12 = scmp.ge.s32.totalorder %s11, 4
    %s18 = sphi 0, %s37
    %s19 = sphi 0, %s33
    %s20 = sphi 0, %s29
    %s21 = sphi 0, %s18
    %s22 = sphi 0, %s19
    %s23 = sphi 0, %s20
    %s24 = sphi 0, %s21
    %s25 = sphi 0, %s22
    %s26 = sphi 0, %s23
    %s44 = sphi 0, %s46
    %s47 = sphi 0, %s44
    %s48 = sphi 0, %s47
    %s64 = sphi 0, %s48
    %s74 = sphi 0, %s76
    %s77 = sphi 0, %s74
    %s78 = sphi 0, %s77
    %s94 = sphi 0, %s78
    %s102 = sphi 0, %s104
    %s105 = sphi 0, %s102
    %s106 = sphi 0, %s105
    %s122 = sphi 0, %s106
    %s130 = sphi 0, %s132
    %s133 = sphi 0, %s130
    %s134 = sphi 0, %s133
    %s150 = sphi 0, %s134
    %s158 = sphi 0, %s160
    %s161 = sphi 0, %s158
    %s162 = sphi 0, %s161
    %s178 = sphi 0, %s162
  $region4: #{tversky_loss_3d.1} parent=0 // loop_header_branch
    %14 = sbr.rel (%p12) target = $region8
  $region5: #{tversky_loss_3d.1} parent=0 // loop_body
    %s16 = ssub.s32 %s11, 1
    %s17 = ssub.s32 %s11, 2
    %s27 = sadd.s32 1, %s20
    %p28 = scmp.ge.s32.totalorder %s27, 1
    %s29 = scalar_select %p28, 0, %s27
    %s30 = sadd.s32 1, %s19
    %s31 = scalar_select %p28, %s30, %s19
    %p32 = scmp.ge.s32.totalorder %s31, 2
    %s33 = scalar_select %p32, 0, %s31
    %s34 = sadd.s32 1, %s18
    %s35 = scalar_select %p32, %s34, %s18
    %p36 = scmp.ge.s32.totalorder %s35, 1
    %s37 = scalar_select %p36, 0, %s35
    %s38 = sadd.s32 %s18, %s20
    %s39 = sadd.s32 %s37, %s29
    %s40 = ssub.s32 %s19, %s33
    %s41 = ssub.s32 %s38, %s39
    %s42 = sor.u32 %s40, %s41
    %p43 = scmp.eq.s32.totalorder %s42, 0
    %s45 = sadd.s32 %s44, 1
    %s46 = scalar_select %p43, %s44, %s45
    %p49 = pneg %p43
    %p50 = scmp.eq.s32.totalorder %s11, 1
    %p51 = por %p49, %p50
    %p52 = scmp.ne.s32.totalorder %s44, %s47
    %p53 = scmp.eq.s32.totalorder %s11, 0
    %p54 = por %p52, %p53
    %p55 = scmp.ne.s32.totalorder %s44, %s47
    %p56 = scmp.eq.s32.totalorder %s16, 1
    %p57 = por %p55, %p56
    %p58 = scmp.ne.s32.totalorder %s47, %s48
    %p59 = scmp.eq.s32.totalorder %s16, 0
    %p60 = por %p58, %p59
    %p61 = scmp.ne.s32.totalorder %s47, %s48
    %p62 = scmp.eq.s32.totalorder %s17, 1
    %p63 = por %p61, %p62
    %p65 = scmp.ne.s32.totalorder %s48, %s64
    %p66 = scmp.eq.s32.totalorder %s17, 0
    %p67 = por %p65, %p66
    %s68 = sadd.s32 %s18, %s20
    %s69 = sadd.s32 %s37, %s29
    %s70 = ssub.s32 %s19, %s33
    %s71 = ssub.s32 %s68, %s69
    %s72 = sor.u32 %s70, %s71
    %p73 = scmp.eq.s32.totalorder %s72, 0
    %s75 = sadd.s32 %s74, 1
    %s76 = scalar_select %p73, %s74, %s75
    %p79 = pneg %p73
    %p80 = scmp.eq.s32.totalorder %s11, 1
    %p81 = por %p79, %p80
    %p82 = scmp.ne.s32.totalorder %s74, %s77
    %p83 = scmp.eq.s32.totalorder %s11, 0
    %p84 = por %p82, %p83
    %p85 = scmp.ne.s32.totalorder %s74, %s77
    %p86 = scmp.eq.s32.totalorder %s16, 1
    %p87 = por %p85, %p86
    %p88 = scmp.ne.s32.totalorder %s77, %s78
    %p89 = scmp.eq.s32.totalorder %s16, 0
    %p90 = por %p88, %p89
    %p91 = scmp.ne.s32.totalorder %s77, %s78
    %p92 = scmp.eq.s32.totalorder %s17, 1
    %p93 = por %p91, %p92
    %p95 = scmp.ne.s32.totalorder %s78, %s94
    %p96 = scmp.eq.s32.totalorder %s17, 0
    %p97 = por %p95, %p96
    %s98 = ssub.s32 %s18, %s37
    %s99 = ssub.s32 %s19, %s33
    %s100 = sor.u32 %s98, %s99
    %p101 = scmp.eq.s32.totalorder %s100, 0
    %s103 = sadd.s32 %s102, 1
    %s104 = scalar_select %p101, %s102, %s103
    %p107 = pneg %p101
    %p108 = scmp.eq.s32.totalorder %s11, 1
    %p109 = por %p107, %p108
    %p110 = scmp.ne.s32.totalorder %s102, %s105
    %p111 = scmp.eq.s32.totalorder %s11, 0
    %p112 = por %p110, %p111
    %p113 = scmp.ne.s32.totalorder %s102, %s105
    %p114 = scmp.eq.s32.totalorder %s16, 1
    %p115 = por %p113, %p114
    %p116 = scmp.ne.s32.totalorder %s105, %s106
    %p117 = scmp.eq.s32.totalorder %s16, 0
    %p118 = por %p116, %p117
    %p119 = scmp.ne.s32.totalorder %s105, %s106
    %p120 = scmp.eq.s32.totalorder %s17, 1
    %p121 = por %p119, %p120
    %p123 = scmp.ne.s32.totalorder %s106, %s122
    %p124 = scmp.eq.s32.totalorder %s17, 0
    %p125 = por %p123, %p124
    %s126 = ssub.s32 %s18, %s37
    %s127 = ssub.s32 %s19, %s33
    %s128 = sor.u32 %s126, %s127
    %p129 = scmp.eq.s32.totalorder %s128, 0
    %s131 = sadd.s32 %s130, 1
    %s132 = scalar_select %p129, %s130, %s131
    %p135 = pneg %p129
    %p136 = scmp.eq.s32.totalorder %s11, 1
    %p137 = por %p135, %p136
    %p138 = scmp.ne.s32.totalorder %s130, %s133
    %p139 = scmp.eq.s32.totalorder %s11, 0
    %p140 = por %p138, %p139
    %p141 = scmp.ne.s32.totalorder %s130, %s133
    %p142 = scmp.eq.s32.totalorder %s16, 1
    %p143 = por %p141, %p142
    %p144 = scmp.ne.s32.totalorder %s133, %s134
    %p145 = scmp.eq.s32.totalorder %s16, 0
    %p146 = por %p144, %p145
    %p147 = scmp.ne.s32.totalorder %s133, %s134
    %p148 = scmp.eq.s32.totalorder %s17, 1
    %p149 = por %p147, %p148
    %p151 = scmp.ne.s32.totalorder %s134, %s150
    %p152 = scmp.eq.s32.totalorder %s17, 0
    %p153 = por %p151, %p152
    %s154 = ssub.s32 %s18, %s37
    %s155 = ssub.s32 %s19, %s33
    %s156 = sor.u32 %s154, %s155
    %p157 = scmp.eq.s32.totalorder %s156, 0
    %s159 = sadd.s32 %s158, 1
    %s160 = scalar_select %p157, %s158, %s159
    %p163 = pneg %p157
    %p164 = scmp.eq.s32.totalorder %s11, 1
    %p165 = por %p163, %p164
    %p166 = scmp.ne.s32.totalorder %s158, %s161
    %p167 = scmp.eq.s32.totalorder %s11, 0
    %p168 = por %p166, %p167
    %p169 = scmp.ne.s32.totalorder %s158, %s161
    %p170 = scmp.eq.s32.totalorder %s16, 1
    %p171 = por %p169, %p170
    %p172 = scmp.ne.s32.totalorder %s161, %s162
    %p173 = scmp.eq.s32.totalorder %s16, 0
    %p174 = por %p172, %p173
    %p175 = scmp.ne.s32.totalorder %s161, %s162
    %p176 = scmp.eq.s32.totalorder %s17, 1
    %p177 = por %p175, %p176
    %p179 = scmp.ne.s32.totalorder %s162, %s178
    %p180 = scmp.eq.s32.totalorder %s17, 0
    %p181 = por %p179, %p180
    %p182 = scmp.le.s32.totalorder 1, %s11
    %p183 = scmp.lt.s32.totalorder %s11, 3
    %p184 = pnand %p182, %p183
    %p185 = pneg %p184
    // Predicated region
    $region9: #{tversky_loss_3d.1} parent=5 // pred_check
      _
    $region10: #{tversky_loss_3d.1} parent=5 // pred_check_branch
      %187 = sbr.rel (%p184) target = $region12
    $region11: #{tversky_loss_3d.1} parent=5 // pred_region
      %s188 = ssub.s32 %s11, 1
    $region12: #{tversky_loss_3d.1} parent=5 // pred_fallthru
      _
    %p189 = scmp.lt.s32.totalorder %s11, 2
    // Predicated region
    $region13: #{tversky_loss_3d.1} parent=5 // pred_check
      %p190 = pneg %p189
    $region14: #{tversky_loss_3d.1} parent=5 // pred_check_branch
      %192 = sbr.rel (%p190) target = $region16
    $region15: #{tversky_loss_3d.1} parent=5 // pred_region
      // Predicated region
      $region17: #{tversky_loss_3d.1} parent=15 // pred_check
        %p193 = pneg %p54
      $region18: #{tversky_loss_3d.1} parent=15 // pred_check_branch
        %195 = sbr.rel (%p193) target = $region20
      $region19: #{tversky_loss_3d.1} parent=15 // pred_region
        %s196 = sadd.s32 %s18, %s20
        %p197 = scmp.lt.s32.totalorder %s19, 1
        %s198 = scalar_select %p197, %s19, 1
        %p199 = scmp.lt.s32.totalorder %s196, 0
        %s200 = scalar_select %p199, %s196, 0
        %s201 = smul.addr %s198, 4
        %s202 = sadd.s32 %s200, %s201
        %s203 = smul.addr %s202, 4
        %s204 = scalar_lea.vmem %s0, %s203
        %s205 = sadd.s32 %s18, %s20
      $region20: #{tversky_loss_3d.1} parent=15 // pred_fallthru
        _
      // Predicated region
      $region21: #{tversky_loss_3d.1} parent=15 // pred_check
        %p206 = pneg %p84
      $region22: #{tversky_loss_3d.1} parent=15 // pred_check_branch
        %208 = sbr.rel (%p206) target = $region24
      $region23: #{tversky_loss_3d.1} parent=15 // pred_region
        %s209 = sadd.s32 %s18, %s20
        %p210 = scmp.lt.s32.totalorder %s19, 1
        %s211 = scalar_select %p210, %s19, 1
        %p212 = scmp.lt.s32.totalorder %s209, 0
        %s213 = scalar_select %p212, %s209, 0
        %s214 = sadd.s32 %s213, %s211
        %s215 = smul.addr %s214, 4
        %s216 = scalar_lea.vmem %s1, %s215
        %s217 = sadd.s32 %s18, %s20
      $region24: #{tversky_loss_3d.1} parent=15 // pred_fallthru
        _
    $region16: #{tversky_loss_3d.1} parent=5 // pred_fallthru
      _
    %p218 = scmp.le.s32.totalorder 1, %s11
    %p219 = scmp.lt.s32.totalorder %s11, 3
    %p220 = pnand %p218, %p219
    %p221 = pneg %p220
    // Predicated region
    $region25: #{tversky_loss_3d.1} parent=5 // pred_check
      _
    $region26: #{tversky_loss_3d.1} parent=5 // pred_check_branch
      %223 = sbr.rel (%p220) target = $region28
    $region27: #{tversky_loss_3d.1} parent=5 // pred_region
      %s224 = ssub.s32 %s11, 1
      %s225 = sadd.s32 %s21, %s23
      %p226 = scmp.lt.s32.totalorder %s22, 1
      %s227 = scalar_select %p226, %s22, 1
      %p228 = scmp.lt.s32.totalorder %s225, 0
      %s229 = scalar_select %p228, %s225, 0
      %s230 = smul.addr %s227, 4
      %s231 = sadd.s32 %s229, %s230
      %s232 = smul.addr %s231, 4
      %s233 = scalar_lea.vmem %s0, %s232
      %p234 = pneg %p60
      %p235 = pneg %p57
      %s236 = sadd.s32 %s21, %s23
      %p237 = scmp.lt.s32.totalorder %s22, 1
      %s238 = scalar_select %p237, %s22, 1
      %p239 = scmp.lt.s32.totalorder %s236, 0
      %s240 = scalar_select %p239, %s236, 0
      %s241 = sadd.s32 %s240, %s238
      %s242 = smul.addr %s241, 4
      %s243 = scalar_lea.vmem %s1, %s242
      %p244 = pneg %p90
      %p245 = pneg %p87
      %p246 = pneg %p118
      %p247 = pneg %p115
      %p248 = scmp.lt.s32.totalorder %s21, 0
      %s249 = scalar_select %p248, %s21, 0
      %p250 = scmp.lt.s32.totalorder %s22, 1
      %s251 = scalar_select %p250, %s22, 1
      %s252 = smul.addr %s249, 2
      %s253 = sadd.s32 %s251, %s252
      %s254 = smul.addr %s253, 4
      %s255 = scalar_lea.vmem %s2, %s254
      %p256 = pneg %p146
      %p257 = pneg %p143
      %p258 = scmp.lt.s32.totalorder %s21, 0
      %s259 = scalar_select %p258, %s21, 0
      %p260 = scmp.lt.s32.totalorder %s22, 1
      %s261 = scalar_select %p260, %s22, 1
      %s262 = smul.addr %s259, 2
      %s263 = sadd.s32 %s261, %s262
      %s264 = smul.addr %s263, 4
      %s265 = scalar_lea.vmem %s3, %s264
      %p266 = pneg %p174
      %p267 = pneg %p171
      %p268 = scmp.lt.s32.totalorder %s21, 0
      %s269 = scalar_select %p268, %s21, 0
      %p270 = scmp.lt.s32.totalorder %s22, 1
      %s271 = scalar_select %p270, %s22, 1
      %s272 = smul.addr %s269, 2
      %s273 = sadd.s32 %s271, %s272
      %s274 = smul.addr %s273, 4
      %s275 = scalar_lea.vmem %s4, %s274
      %s276 = sadd.s32 %s21, %s23
      %p277 = scmp.lt.s32.totalorder %s22, 1
      %s278 = scalar_select %p277, %s22, 1
      %p279 = scmp.lt.s32.totalorder %s276, 0
      %s280 = scalar_select %p279, %s276, 0
      %s281 = smul.addr %s278, 4
      %s282 = sadd.s32 %s280, %s281
      %s283 = smul.addr %s282, 4
      %s284 = scalar_lea.vmem %s0, %s283
      %s285 = sadd.s32 %s21, %s23
      %s286 = sadd.s32 %s21, %s23
      %p287 = scmp.lt.s32.totalorder %s22, 1
      %s288 = scalar_select %p287, %s22, 1
      %p289 = scmp.lt.s32.totalorder %s286, 0
      %s290 = scalar_select %p289, %s286, 0
      %s291 = sadd.s32 %s290, %s288
      %s292 = smul.addr %s291, 4
      %s293 = scalar_lea.vmem %s1, %s292
      %s294 = sadd.s32 %s21, %s23
      %p295 = scmp.lt.s32.totalorder %s21, 0
      %s296 = scalar_select %p295, %s21, 0
      %p297 = scmp.lt.s32.totalorder %s22, 1
      %s298 = scalar_select %p297, %s22, 1
      %s299 = smul.addr %s296, 2
      %s300 = sadd.s32 %s298, %s299
      %s301 = smul.addr %s300, 4
      %s302 = scalar_lea.vmem %s2, %s301
      %p303 = scmp.lt.s32.totalorder %s21, 0
      %s304 = scalar_select %p303, %s21, 0
      %p305 = scmp.lt.s32.totalorder %s22, 1
      %s306 = scalar_select %p305, %s22, 1
      %s307 = smul.addr %s304, 2
      %s308 = sadd.s32 %s306, %s307
      %s309 = smul.addr %s308, 4
      %s310 = scalar_lea.vmem %s3, %s309
      %p311 = scmp.lt.s32.totalorder %s21, 0
      %s312 = scalar_select %p311, %s21, 0
      %p313 = scmp.lt.s32.totalorder %s22, 1
      %s314 = scalar_select %p313, %s22, 1
      %s315 = smul.addr %s312, 2
      %s316 = sadd.s32 %s314, %s315
      %s317 = smul.addr %s316, 4
      %s318 = scalar_lea.vmem %s4, %s317
      %p319 = scmp.eq.s32.totalorder %s23, 0
      // Predicated region
      $region29: #{tversky_loss_3d.1} parent=27 // pred_check
        %p320 = pneg %p319
      $region30: #{tversky_loss_3d.1} parent=27 // pred_check_branch
        %322 = sbr.rel (%p320) target = $region32
      $region31: #{tversky_loss_3d.1} parent=27 // pred_region
        %323 = vst [vmem:[%s302] sm:$0xf] 0.0
        %324 = vst [vmem:[%s310] sm:$0xf] 0.0
        %325 = vst [vmem:[%s318] sm:$0xf] 0.0
      $region32: #{tversky_loss_3d.1} parent=27 // pred_fallthru
        _
      %v326 = vld [vmem:[%s284] sm:$0xf]
      %s327 = scalar_lea.vmem %s284, 4
      %v328 = vld [vmem:[%s327] sm:$0xf]
      %s329 = scalar_lea.vmem %s284, 8
      %v330 = vld [vmem:[%s329] sm:$0xf]
      %s331 = scalar_lea.vmem %s284, 12
      %v332 = vld [vmem:[%s331] sm:$0xf]
      %v333 = vmax.f32 %v326, %v328
      %v334 = vmax.f32 %v333, %v330
      %v335 = vmax.f32 %v334, %v332
      %v336 = vsub.f32 %v326, %v335
      %v337 = vmul.f32 %v336, 1.442695
      %v338 = vpow.pop %v337
      %v339 = vsub.f32 %v328, %v335
      %v340 = vmul.f32 %v339, 1.442695
      %v341 = vpow.pop %v340
      %v342 = vsub.f32 %v330, %v335
      %v343 = vmul.f32 %v342, 1.442695
      %v344 = vpow.pop %v343
      %v345 = vsub.f32 %v332, %v335
      %v346 = vmul.f32 %v345, 1.442695
      %v347 = vpow.pop %v346
      %v348 = vadd.f32 %v338, %v341
      %v349 = vadd.f32 %v348, %v344
      %v350 = vadd.f32 %v349, %v347
      %v351 = vrcp.pop %v350
      %v352 = vld [vmem:[%s293] sm:$0xf]
      %v353 = vmul.f32 %v338, %v351
      %vm354 = vcmp.eq.s32.totalorder %v352, 0
      %v355 = vsel %vm354, %v353, 0.0
      %vm356 = vcmask 1043456
      %v357 = vsel %vm356, %v355, 0.0
      %v358 = vrot.slane %v357, 4
      %v359 = vadd.f32 %v357, %v358
      %v360 = vrot.slane %v359, 2
      %v361 = vadd.f32 %v359, %v360
      %v362 = vrot.slane %v361, 1
      %v363 = vadd.f32 %v361, %v362
      %v364 = vsel %vm356, %v353, 0.0
      %v365 = vrot.slane %v364, 4
      %v366 = vadd.f32 %v364, %v365
      %v367 = vrot.slane %v366, 2
      %v368 = vadd.f32 %v366, %v367
      %v369 = vrot.slane %v368, 1
      %v370 = vadd.f32 %v368, %v369
      %v371 = vsel %vm354, 1.0, 0.0
      %v372 = vsel %vm356, %v371, 0.0
      %v373 = vrot.slane %v372, 4
      %v374 = vadd.f32 %v372, %v373
      %v375 = vrot.slane %v374, 2
      %v376 = vadd.f32 %v374, %v375
      %v377 = vrot.slane %v376, 1
      %v378 = vadd.f32 %v376, %v377
      %v379 = vld [vmem:[%s302] sm:$0x1]
      %v380 = vadd.f32 %v379, %v363
      %381 = vst [vmem:[%s302] sm:$0x1] %v380
      %v382 = vld [vmem:[%s310] sm:$0x1]
      %v383 = vadd.f32 %v382, %v370
      %384 = vst [vmem:[%s310] sm:$0x1] %v383
      %v385 = vld [vmem:[%s318] sm:$0x1]
      %v386 = vadd.f32 %v385, %v378
      %387 = vst [vmem:[%s318] sm:$0x1] %v386
      %v388 = vmul.f32 %v341, %v351
      %vm389 = vcmp.eq.s32.totalorder %v352, 1
      %v390 = vsel %vm389, %v388, 0.0
      %v391 = vsel %vm356, %v390, 0.0
      %v392 = vrot.slane %v391, 4
      %v393 = vadd.f32 %v391, %v392
      %v394 = vrot.slane %v393, 2
      %v395 = vadd.f32 %v393, %v394
      %v396 = vrot.slane %v395, 1
      %v397 = vadd.f32 %v395, %v396
      %v398 = vsel %vm356, %v388, 0.0
      %v399 = vrot.slane %v398, 4
      %v400 = vadd.f32 %v398, %v399
      %v401 = vrot.slane %v400, 2
      %v402 = vadd.f32 %v400, %v401
      %v403 = vrot.slane %v402, 1
      %v404 = vadd.f32 %v402, %v403
      %v405 = vsel %vm389, 1.0, 0.0
      %v406 = vsel %vm356, %v405, 0.0
      %v407 = vrot.slane %v406, 4
      %v408 = vadd.f32 %v406, %v407
      %v409 = vrot.slane %v408, 2
      %v410 = vadd.f32 %v408, %v409
      %v411 = vrot.slane %v410, 1
      %v412 = vadd.f32 %v410, %v411
      %v413 = vld [vmem:[%s302 + $0x1] sm:$0x1]
      %v414 = vadd.f32 %v413, %v397
      %415 = vst [vmem:[%s302 + $0x1] sm:$0x1] %v414
      %v416 = vld [vmem:[%s310 + $0x1] sm:$0x1]
      %v417 = vadd.f32 %v416, %v404
      %418 = vst [vmem:[%s310 + $0x1] sm:$0x1] %v417
      %v419 = vld [vmem:[%s318 + $0x1] sm:$0x1]
      %v420 = vadd.f32 %v419, %v412
      %421 = vst [vmem:[%s318 + $0x1] sm:$0x1] %v420
      %v422 = vmul.f32 %v344, %v351
      %vm423 = vcmp.eq.s32.totalorder %v352, 2
      %v424 = vsel %vm423, %v422, 0.0
      %v425 = vsel %vm356, %v424, 0.0
      %v426 = vrot.slane %v425, 4
      %v427 = vadd.f32 %v425, %v426
      %v428 = vrot.slane %v427, 2
      %v429 = vadd.f32 %v427, %v428
      %v430 = vrot.slane %v429, 1
      %v431 = vadd.f32 %v429, %v430
      %v432 = vsel %vm356, %v422, 0.0
      %v433 = vrot.slane %v432, 4
      %v434 = vadd.f32 %v432, %v433
      %v435 = vrot.slane %v434, 2
      %v436 = vadd.f32 %v434, %v435
      %v437 = vrot.slane %v436, 1
      %v438 = vadd.f32 %v436, %v437
      %v439 = vsel %vm423, 1.0, 0.0
      %v440 = vsel %vm356, %v439, 0.0
      %v441 = vrot.slane %v440, 4
      %v442 = vadd.f32 %v440, %v441
      %v443 = vrot.slane %v442, 2
      %v444 = vadd.f32 %v442, %v443
      %v445 = vrot.slane %v444, 1
      %v446 = vadd.f32 %v444, %v445
      %v447 = vld [vmem:[%s302 + $0x2] sm:$0x1]
      %v448 = vadd.f32 %v447, %v431
      %449 = vst [vmem:[%s302 + $0x2] sm:$0x1] %v448
      %v450 = vld [vmem:[%s310 + $0x2] sm:$0x1]
      %v451 = vadd.f32 %v450, %v438
      %452 = vst [vmem:[%s310 + $0x2] sm:$0x1] %v451
      %v453 = vld [vmem:[%s318 + $0x2] sm:$0x1]
      %v454 = vadd.f32 %v453, %v446
      %455 = vst [vmem:[%s318 + $0x2] sm:$0x1] %v454
      %v456 = vmul.f32 %v347, %v351
      %vm457 = vcmp.eq.s32.totalorder %v352, 3
      %v458 = vsel %vm457, %v456, 0.0
      %v459 = vsel %vm356, %v458, 0.0
      %v460 = vrot.slane %v459, 4
      %v461 = vadd.f32 %v459, %v460
      %v462 = vrot.slane %v461, 2
      %v463 = vadd.f32 %v461, %v462
      %v464 = vrot.slane %v463, 1
      %v465 = vadd.f32 %v463, %v464
      %v466 = vsel %vm356, %v456, 0.0
      %v467 = vrot.slane %v466, 4
      %v468 = vadd.f32 %v466, %v467
      %v469 = vrot.slane %v468, 2
      %v470 = vadd.f32 %v468, %v469
      %v471 = vrot.slane %v470, 1
      %v472 = vadd.f32 %v470, %v471
      %v473 = vsel %vm457, 1.0, 0.0
      %v474 = vsel %vm356, %v473, 0.0
      %v475 = vrot.slane %v474, 4
      %v476 = vadd.f32 %v474, %v475
      %v477 = vrot.slane %v476, 2
      %v478 = vadd.f32 %v476, %v477
      %v479 = vrot.slane %v478, 1
      %v480 = vadd.f32 %v478, %v479
      %v481 = vld [vmem:[%s302 + $0x3] sm:$0x1]
      %v482 = vadd.f32 %v481, %v465
      %483 = vst [vmem:[%s302 + $0x3] sm:$0x1] %v482
      %v484 = vld [vmem:[%s310 + $0x3] sm:$0x1]
      %v485 = vadd.f32 %v484, %v472
      %486 = vst [vmem:[%s310 + $0x3] sm:$0x1] %v485
      %v487 = vld [vmem:[%s318 + $0x3] sm:$0x1]
      %v488 = vadd.f32 %v487, %v480
      %489 = vst [vmem:[%s318 + $0x3] sm:$0x1] %v488
      %p490 = scmp.lt.s32.totalorder %s21, 0
      %s491 = scalar_select %p490, %s21, 0
      %p492 = scmp.lt.s32.totalorder %s22, 1
      %s493 = scalar_select %p492, %s22, 1
      %s494 = smul.addr %s491, 2
      %s495 = sadd.s32 %s493, %s494
      %s496 = smul.addr %s495, 4
      %s497 = scalar_lea.vmem %s2, %s496
      %p498 = scmp.lt.s32.totalorder %s21, 0
      %s499 = scalar_select %p498, %s21, 0
      %p500 = scmp.lt.s32.totalorder %s22, 1
      %s501 = scalar_select %p500, %s22, 1
      %s502 = smul.addr %s499, 2
      %s503 = sadd.s32 %s501, %s502
      %s504 = smul.addr %s503, 4
      %s505 = scalar_lea.vmem %s3, %s504
      %p506 = scmp.lt.s32.totalorder %s21, 0
      %s507 = scalar_select %p506, %s21, 0
      %p508 = scmp.lt.s32.totalorder %s22, 1
      %s509 = scalar_select %p508, %s22, 1
      %s510 = smul.addr %s507, 2
      %s511 = sadd.s32 %s509, %s510
      %s512 = smul.addr %s511, 4
      %s513 = scalar_lea.vmem %s4, %s512
      // Predicated region
      $region33: #{tversky_loss_3d.1} parent=27 // pred_check
        %p514 = pneg %p115
      $region34: #{tversky_loss_3d.1} parent=27 // pred_check_branch
        %516 = sbr.rel (%p514) target = $region36
      $region35: #{tversky_loss_3d.1} parent=27 // pred_region
        _
      $region36: #{tversky_loss_3d.1} parent=27 // pred_fallthru
        _
      // Predicated region
      $region37: #{tversky_loss_3d.1} parent=27 // pred_check
        %p517 = pneg %p143
      $region38: #{tversky_loss_3d.1} parent=27 // pred_check_branch
        %519 = sbr.rel (%p517) target = $region40
      $region39: #{tversky_loss_3d.1} parent=27 // pred_region
        _
      $region40: #{tversky_loss_3d.1} parent=27 // pred_fallthru
        _
      // Predicated region
      $region41: #{tversky_loss_3d.1} parent=27 // pred_check
        %p520 = pneg %p171
      $region42: #{tversky_loss_3d.1} parent=27 // pred_check_branch
        %522 = sbr.rel (%p520) target = $region44
      $region43: #{tversky_loss_3d.1} parent=27 // pred_region
        _
      $region44: #{tversky_loss_3d.1} parent=27 // pred_fallthru
        _
    $region28: #{tversky_loss_3d.1} parent=5 // pred_fallthru
      _
    %p523 = scmp.le.s32.totalorder 2, %s11
    // Predicated region
    $region45: #{tversky_loss_3d.1} parent=5 // pred_check
      %p524 = pneg %p523
    $region46: #{tversky_loss_3d.1} parent=5 // pred_check_branch
      %526 = sbr.rel (%p524) target = $region48
    $region47: #{tversky_loss_3d.1} parent=5 // pred_region
      %s527 = ssub.s32 %s11, 2
      // Predicated region
      $region49: #{tversky_loss_3d.1} parent=47 // pred_check
        %p528 = pneg %p121
      $region50: #{tversky_loss_3d.1} parent=47 // pred_check_branch
        %530 = sbr.rel (%p528) target = $region52
      $region51: #{tversky_loss_3d.1} parent=47 // pred_region
        %p531 = scmp.lt.s32.totalorder %s24, 0
        %s532 = scalar_select %p531, %s24, 0
        %p533 = scmp.lt.s32.totalorder %s25, 1
        %s534 = scalar_select %p533, %s25, 1
        %s535 = smul.addr %s532, 2
        %s536 = sadd.s32 %s534, %s535
        %s537 = smul.addr %s536, 4
        %s538 = scalar_lea.vmem %s2, %s537
      $region52: #{tversky_loss_3d.1} parent=47 // pred_fallthru
        _
      // Predicated region
      $region53: #{tversky_loss_3d.1} parent=47 // pred_check
        %p539 = pneg %p149
      $region54: #{tversky_loss_3d.1} parent=47 // pred_check_branch
        %541 = sbr.rel (%p539) target = $region56
      $region55: #{tversky_loss_3d.1} parent=47 // pred_region
        %p542 = scmp.lt.s32.totalorder %s24, 0
        %s543 = scalar_select %p542, %s24, 0
        %p544 = scmp.lt.s32.totalorder %s25, 1
        %s545 = scalar_select %p544, %s25, 1
        %s546 = smul.addr %s543, 2
        %s547 = sadd.s32 %s545, %s546
        %s548 = smul.addr %s547, 4
        %s549 = scalar_lea.vmem %s3, %s548
      $region56: #{tversky_loss_3d.1} parent=47 // pred_fallthru
        _
      // Predicated region
      $region57: #{tversky_loss_3d.1} parent=47 // pred_check
        %p550 = pneg %p177
      $region58: #{tversky_loss_3d.1} parent=47 // pred_check_branch
        %552 = sbr.rel (%p550) target = $region60
      $region59: #{tversky_loss_3d.1} parent=47 // pred_region
        %p553 = scmp.lt.s32.totalorder %s24, 0
        %s554 = scalar_select %p553, %s24, 0
        %p555 = scmp.lt.s32.totalorder %s25, 1
        %s556 = scalar_select %p555, %s25, 1
        %s557 = smul.addr %s554, 2
        %s558 = sadd.s32 %s556, %s557
        %s559 = smul.addr %s558, 4
        %s560 = scalar_lea.vmem %s4, %s559
      $region60: #{tversky_loss_3d.1} parent=47 // pred_fallthru
        _
    $region48: #{tversky_loss_3d.1} parent=5 // pred_fallthru
      _
  $region6: #{tversky_loss_3d.1} parent=0 // loop_footer
    %s15 = sadd.s32 1, %s11
  $region7: #{tversky_loss_3d.1} parent=0 // loop_footer_branch
    %10 = sbr.rel target = $region3
  $region8: #{tversky_loss_3d.1} parent=0 // loop_exit
    _

</llo_original>
